<compile_context>
chip_gen: v5e
topology: v5e:2x2
jax: 0.10.0
libtpu: 0.0.40
codegen_flags: <defaults>
</compile_context>

<pallas_src>
import functools

import jax
import jax.numpy as jnp
import numpy as np
from jax.experimental import pallas as pl
from jax.experimental.pallas import tpu as pltpu


def _round_up(x, m):
    return (x + m - 1) // m * m


def _cdiv(a, b):
    return (a + b - 1) // b


# ---------------------------------------------------------------------------
# Eager pltpu.roll probes (run once, before tracing the decoder):
#   * direction: does pltpu.roll match jnp.roll on this backend?
#   * packed bf16 lane rotation: if supported, cast the activation to bf16 once
#     BEFORE the 9 taps; otherwise roll in f32 and cast per (vreg-resident) tap.
# ---------------------------------------------------------------------------
def _roll_probe(dtype, shift, lanes):
    def kern(x_ref, o_ref):
        o_ref[...] = pltpu.roll(x_ref[...], shift, axis=1)

    base = (jnp.arange(8 * lanes) % 256).astype(jnp.float32).reshape(8, lanes)
    x = base.astype(dtype)
    y = pl.pallas_call(
        kern, out_shape=jax.ShapeDtypeStruct((8, lanes), dtype))(x)
    y = np.asarray(jax.device_get(y)).astype(np.float32)
    ref = np.asarray(jax.device_get(x)).astype(np.float32)
    return y, ref


def probe_roll():
    """Returns (roll_matches_jnp, bf16_roll_ok)."""
    y, ref = _roll_probe(jnp.float32, 1, 128)
    if np.array_equal(y, np.roll(ref, 1, axis=1)):
        matches_jnp = True
    elif np.array_equal(y, np.roll(ref, -1, axis=1)):
        matches_jnp = False
    else:
        raise RuntimeError("unexpected pltpu.roll semantics")
    try:
        sh, lanes = 365, 384                 # representative of the real kernel
        y, ref = _roll_probe(jnp.bfloat16, sh, lanes)
        exp = np.roll(ref, sh if matches_jnp else -sh, axis=1)
        bf16_roll_ok = bool(np.array_equal(y, exp))
    except Exception:                        # lowering gap -> f32 rolls fallback
        bf16_roll_ok = False
    return matches_jnp, bf16_roll_ok


# ---------------------------------------------------------------------------
# Fused decoder kernel (one group of images per grid step)
# ---------------------------------------------------------------------------
def _decoder_kernel(x_ref, mask_ref, wres_ref, bres_ref, wdec_ref, bdec_ref,
                    o_ref, *, tap_shifts, cast_before_roll):
    """Fused Resblocks + polyphase ConvTranspose2d.

    x_ref    : (1, nf, L) f32   lane-dense canvas (zero borders / tails)
    mask_ref : (1, L)     f32   1 exactly at interior lanes
    wres_ref : (6, 9, nf, nf) bf16   per-tap resblock conv weights
    bres_ref : (6, nf, 1) f32
    wdec_ref : (9, 16, nf) bf16      per-tap polyphase deconv weights (12 real rows)
    bdec_ref : (16, 1) f32
    o_ref    : (1, 16, L) bf16

    Invariant (load-bearing): interior tap reads never leave their own image's
    [g*M, g*M+lc) lane segment, so circular rolls + the post-conv mask are
    exactly SAME zero-padding.  The mask must not be dropped anywhere except
    the final deconv output.
    """
    nf = x_ref.shape[1]
    L = x_ref.shape[2]

    # Hoisted interior mask: single broadcast (JAX does not CSE broadcast_in_dim).
    mask = jnp.broadcast_to(mask_ref[...], (nf, L))               # (nf, L) f32

    def conv(src, widx, b, *, relu, out_mask):
        # src : (Cin, L) f32 ; widx None -> deconv weights ; b : (Cout, 1) f32
        s = jnp.maximum(src, 0.0) if relu else src                # hoisted ReLU
        if cast_before_roll:
            s = s.astype(jnp.bfloat16)                            # one cast, then rolls
        acc = None
        for t, sh in enumerate(tap_shifts):
            tap = s if sh == 0 else pltpu.roll(s, sh, axis=1)     # XLU lane rotate
            if not cast_before_roll:
                tap = tap.astype(jnp.bfloat16)                    # vreg-resident cast
            w_t = wdec_ref[t] if widx is None else wres_ref[widx, t]
            p = jnp.dot(w_t, tap, preferred_element_type=jnp.float32)
            acc = p if acc is None else acc + p                   # f32 accumulation
        acc = acc + b
        return acc * out_mask if out_mask is not None else acc

    x0 = x_ref[0]                                                 # (nf, L) f32
    r = x0
    for blk in range(3):                                          # Resblocks trunk
        h = conv(r, 2 * blk, bres_ref[2 * blk], relu=True, out_mask=mask)
        r = r + conv(h, 2 * blk + 1, bres_ref[2 * blk + 1], relu=True,
                     out_mask=mask)
    trunk = r + x0                                                # outer skip

    # Polyphase ConvTranspose2d -> 16 lane-dense rows (12 used + 4 zero rows).
    # No mask here: the wrapper only reads interior lanes of the 12 real rows.
    out16 = conv(trunk, None, bdec_ref[...], relu=False, out_mask=None)
    o_ref[0] = out16.astype(o_ref.dtype)


# ---------------------------------------------------------------------------
# Parameter packing / canvas helpers (tiny XLA glue in the wrapper)
# ---------------------------------------------------------------------------
def _pack_conv3x3_taps(w_hwio):
    """(3,3,Cin,Cout) HWIO -> (9, Cout, Cin) bf16, tap t = (dr+1)*3 + (dc+1)."""
    k, _, cin, cout = w_hwio.shape
    w = jnp.transpose(w_hwio, (0, 1, 3, 2)).reshape(k * k, cout, cin)
    return w.astype(jnp.bfloat16)


def _pack_deconv_polyphase_taps(w_t):
    """PyTorch ConvTranspose2d weight (Cin, 3, 5, 5), s=2, p=2, op=1 -> per-tap
    polyphase form (9, 16, Cin) bf16 (12 real rows + 4 zero rows).

    out[co, 2j+rh, 2i+rw] = b[co]
        + sum_{dr,dc,ci} w_t[ci, co, kh(rh,dr), kw(rw,dc)] * x[ci, j+dr, i+dc]
    with kh(0,dr) = 2-2dr (dr in {-1,0,1}) and kh(1,dr) = 3-2dr (dr in {0,1});
    taps outside a phase's support get zero weights.  Row index within a tap
    is (rh*2 + rw)*3 + co.
    """
    cin = w_t.shape[0]
    zero = jnp.zeros((3, cin), w_t.dtype)
    taps = []
    for dr in (-1, 0, 1):
        for dc in (-1, 0, 1):
            rows = []
            for rh in (0, 1):
                kh = 2 - 2 * dr if rh == 0 else (3 - 2 * dr if dr >= 0 else None)
                for rw in (0, 1):
                    kw = 2 - 2 * dc if rw == 0 else (3 - 2 * dc if dc >= 0 else None)
                    rows.append(zero if (kh is None or kw is None)
                                else w_t[:, :, kh, kw].T)          # (3, Cin)
            taps.append(jnp.concatenate(rows, axis=0))             # (12, Cin)
    w = jnp.stack(taps, axis=0)                                    # (9, 12, Cin)
    w = jnp.pad(w, ((0, 0), (0, 4), (0, 0)))                       # (9, 16, Cin)
    return w.astype(jnp.bfloat16)


def _col(b):
    return jnp.reshape(b, (-1, 1)).astype(jnp.float32)


def _interior_mask(h, w, m_img):
    hp, wp = h + 2, w + 2
    m2 = np.zeros((hp, wp), np.float32)
    m2[1:h + 1, 1:w + 1] = 1.0
    full = np.zeros((1, m_img), np.float32)
    full[0, :hp * wp] = m2.reshape(-1)
    return jnp.asarray(full)


# ---------------------------------------------------------------------------
# Forward pass
# ---------------------------------------------------------------------------
def feature_decoder(x_nchw, params, *, roll_matches_jnp=True,
                    cast_before_roll=False, num_grid_steps=2):
    """FeatureDecoder forward. (N, nf, H, W) NCHW -> (N, 3, 2H, 2W) f32.

    num_grid_steps: images are folded onto the lane axis within each grid step;
    the default of 2 keeps both v7x TensorCores busy.  On single-TC v5e/v6e
    pass 1 to fold the whole batch into a single fat step.
    """
    n, nf, h, w = x_nchw.shape
    hp, wp = h + 2, w + 2
    lc = hp * wp
    m_img = _round_up(lc, 128)
    assert lc <= m_img  # roll/mask SAME-padding invariant relies on this

    steps = max(1, min(n, num_grid_steps))
    group = _cdiv(n, steps)
    n_pad = steps * group
    L = group * m_img

    # --- pack parameters (bf16 MXU weights, f32 column biases), 4 stacked refs
    w_res = jnp.stack([_pack_conv3x3_taps(wt)
                       for rb in params["resblocks"] for wt in (rb[0], rb[2])])
    b_res = jnp.stack([_col(bt)
                       for rb in params["resblocks"] for bt in (rb[1], rb[3])])
    w_dec = _pack_deconv_polyphase_taps(params["deconv_w"])        # (9, 16, nf)
    b_dec = jnp.pad(_col(jnp.tile(params["deconv_b"], 4)),
                    ((0, 4), (0, 0)))                              # (16, 1)

    # --- zero-bordered, lane-dense canvas (steps, nf, group*M) + interior mask
    xc = jnp.pad(x_nchw.astype(jnp.float32), ((0, 0), (0, 0), (1, 1), (1, 1)))
    xc = xc.reshape(n, nf, lc)
    xc = jnp.pad(xc, ((0, n_pad - n), (0, 0), (0, m_img - lc)))
    xc = xc.reshape(steps, group, nf, m_img)
    xc = jnp.transpose(xc, (0, 2, 1, 3)).reshape(steps, nf, L)
    mask = jnp.tile(_interior_mask(h, w, m_img), (1, group))       # (1, L)

    # Tap shifts so that tap[:, q] == canvas[:, q + dr*wp + dc].  Interior taps
    # never cross an image's lane segment, so circular rolls are safe.
    tap_shifts = []
    for dr in (-1, 0, 1):
        for dc in (-1, 0, 1):
            d = dr * wp + dc
            tap_shifts.append(((-d) % L) if roll_matches_jnp else (d % L))

    kernel = functools.partial(_decoder_kernel,
                               tap_shifts=tuple(tap_shifts),
                               cast_before_roll=cast_before_roll)

    out = pl.pallas_call(
        kernel,
        out_shape=jax.ShapeDtypeStruct((steps, 16, L), jnp.bfloat16),
        grid=(steps,),
        in_specs=[
            pl.BlockSpec((1, nf, L), lambda i: (i, 0, 0)),
            pl.BlockSpec((1, L), lambda i: (0, 0)),
            pl.BlockSpec(w_res.shape, lambda i: (0, 0, 0, 0)),
            pl.BlockSpec(b_res.shape, lambda i: (0, 0, 0)),
            pl.BlockSpec(w_dec.shape, lambda i: (0, 0, 0)),
            pl.BlockSpec(b_dec.shape, lambda i: (0, 0)),
        ],
        out_specs=pl.BlockSpec((1, 16, L), lambda i: (i, 0, 0)),
        compiler_params=pltpu.CompilerParams(
            dimension_semantics=("parallel",)),
    )(xc, mask, w_res, b_res, w_dec, b_dec)

    # Un-fold the batch and interleave the 4 deconv phases straight into NCHW.
    y = out.reshape(steps, 16, group, m_img)
    y = jnp.transpose(y, (0, 2, 1, 3)).reshape(n_pad, 16, m_img)[:n]
    y = y[:, :12, :lc].reshape(n, 2, 2, 3, hp, wp)[:, :, :, :, 1:h + 1, 1:w + 1]
    y = jnp.transpose(y, (0, 3, 4, 1, 5, 2)).reshape(n, 3, 2 * h, 2 * w)
    return y.astype(jnp.float32)


# ---------------------------------------------------------------------------
# Pure-JAX reference (independent path: XLA convs + explicit zero-insertion
# transposed conv) used to validate the fused kernel numerically.
# ---------------------------------------------------------------------------
def reference_forward(x_nchw, params):
    dn = ("NCHW", "HWIO", "NCHW")

    def conv3(v, wgt, b):
        return jax.lax.conv_general_dilated(
            v, wgt, (1, 1), ((1, 1), (1, 1)), dimension_numbers=dn
        ) + b.reshape(1, -1, 1, 1)

    x = x_nchw.astype(jnp.float32)
    r = x
    for (w1, b1, w2, b2) in params["resblocks"]:
        hmid = conv3(jax.nn.relu(r), w1, b1)
        r = r + conv3(jax.nn.relu(hmid), w2, b2)
    t = x + r
    n, c, hh, ww = t.shape
    up = jnp.zeros((n, c, 2 * hh - 1, 2 * ww - 1), t.dtype)
    up = up.at[:, :, ::2, ::2].set(t)
    up = jnp.pad(up, ((0, 0), (0, 0), (2, 3), (2, 3)))
    wf = jnp.transpose(params["deconv_w"][:, :, ::-1, ::-1], (2, 3, 0, 1))
    y = jax.lax.conv_general_dilated(up, wf, (1, 1), "VALID",
                                     dimension_numbers=dn)
    return y + params["deconv_b"].reshape(1, -1, 1, 1)


def init_params(key, nf):
    """Deterministic synthetic parameters (no checkpoint loading)."""
    keys = jax.random.split(key, 14)
    s3 = 0.2 / jnp.sqrt(9.0 * nf)
    s5 = 0.2 / jnp.sqrt(25.0 * nf)
    rb = []
    k = 0
    for _ in range(3):
        w1 = s3 * jax.random.normal(keys[k], (3, 3, nf, nf), jnp.float32); k += 1
        b1 = 0.05 * jax.random.normal(keys[k], (nf,), jnp.float32); k += 1
        w2 = s3 * jax.random.normal(keys[k], (3, 3, nf, nf), jnp.float32); k += 1
        b2 = 0.05 * jax.random.normal(keys[k], (nf,), jnp.float32); k += 1
        rb.append((w1, b1, w2, b2))
    deconv_w = s5 * jax.random.normal(keys[k], (nf, 3, 5, 5), jnp.float32); k += 1
    deconv_b = 0.05 * jax.random.normal(keys[k], (3,), jnp.float32)
    return {"resblocks": rb, "deconv_w": deconv_w, "deconv_b": deconv_b}


if __name__ == "__main__":
    key = jax.random.PRNGKey(0)
    k_x, k_p = jax.random.split(key)

    # Small shapes consistent with the module: batch=2, nf=8 channels, 16x16.
    N, NF, H, W = 2, 8, 16, 16
    x_nchw = jax.random.normal(k_x, (N, NF, H, W), jnp.float32)
    params = init_params(k_p, NF)

    roll_matches_jnp, bf16_roll_ok = probe_roll()   # eager, before tracing

    fwd = jax.jit(functools.partial(
        feature_decoder, params=params,
        roll_matches_jnp=roll_matches_jnp,
        cast_before_roll=bf16_roll_ok,
        num_grid_steps=2))
    y = jax.block_until_ready(fwd(x_nchw))

    assert y.shape == (N, 3, 2 * H, 2 * W), y.shape
    assert y.dtype == jnp.float32
    assert bool(jnp.all(jnp.isfinite(y)))

    # Validate against the pure-JAX reference (bf16 MXU operands + bf16 output
    # writeback -> tolerance).
    y_ref = reference_forward(x_nchw, params)
    max_err = float(jnp.max(jnp.abs(y - y_ref)))
    assert bool(jnp.allclose(y, y_ref, atol=3e-2, rtol=3e-2)), max_err

    print("KERNEL_OK")
</pallas_src>

<mosaic_0001>
module attributes {stable_mosaic.version = 11 : i64} {
  func.func @kern(%arg0: memref<8x128xf32, #tpu.memory_space<vmem>>, %arg1: memref<8x128xf32, #tpu.memory_space<vmem>>) attributes {dimension_semantics = [], scalar_prefetch = 0 : i64, scratch_operands = 0 : i64, tpu.core_type = #tpu.core_type<tc>} {
    %c0 = arith.constant 0 : index
    %c0_0 = arith.constant 0 : index
    %0 = vector.load %arg0[%c0, %c0_0] : memref<8x128xf32, #tpu.memory_space<vmem>>, vector<8x128xf32>
    %c1_i32 = arith.constant 1 : i32
    %1 = tpu.dynamic_rotate %0 by %c1_i32 dim 1 : vector<8x128xf32>, i32 -> vector<8x128xf32>
    %c0_1 = arith.constant 0 : index
    %c0_2 = arith.constant 0 : index
    %2 = vector.load %arg1[%c0_1, %c0_2] : memref<8x128xf32, #tpu.memory_space<vmem>>, vector<8x128xf32>
    tpu.vector_store %arg1[%c0_1, %c0_2], %1 {strides = array<i32>} : memref<8x128xf32, #tpu.memory_space<vmem>>, vector<8x128xf32>,
    return
  }
}

</mosaic_0001>

<llo_original>
// kernel: tpu_custom_call.1
$region0: #{tpu_custom_call.1}
  #allocation0 [shape = 'u32[]', space=smem, size = 0x4, offset = 0x4, fixed_abs, tag = 'smem constant byte address 0x4 - core index']
  #allocation1 [shape = 'u32[72,128]{1,0:T(1,128)}', space=vmem, size = 0x9000, scoped, tag = 'internal scratch']
  %s0 = inlined_call_operand.hbm [shape: f32[8,128], index: 0, kind: input, shape index: {}]
  %s1 = inlined_call_operand.hbm [shape: f32[8,128], index: 1, kind: output, shape index: {}]
  %s2 = sld [smem:[#allocation0]]
  $region18: #{tpu_custom_call.1} parent=0
    _
  %s4 = ssub.s32 1, %s2
  %s5 = scalar_select 0, %s4, %s2
  $region1: #{tpu_custom_call.1} parent=0
    #allocation2 [shape = 'u8[4096]{0}', space=vmem, size = 0x1000, scoped, tag = 'input window, operand 0, single buffered']
    #allocation3 [shape = 's32[1]{0}', space=sflag, size = 0x4, scoped, tag = 'scoped memory for tpu_custom_call.1']
    #allocation4 [shape = 's32[1]{0}', space=sflag, size = 0x4, scoped, tag = 'scoped memory for tpu_custom_call.1']
    #allocation5 [shape = 'u8[4096]{0}', space=vmem, size = 0x1000, scoped, tag = 'output window, operand 0, single buffered']
    %6 = vsyncpa [#allocation3], 0
    %7 = vsyncpa [#allocation4], 0
    // Predicated region
    $region2: #{tpu_custom_call.1} parent=1 // pred_check
      _
    $region3: #{tpu_custom_call.1} parent=1 // pred_check_branch
      %9 = sbr.rel (0) target = $region5
    $region4: #{tpu_custom_call.1} parent=1 // pred_region
      %11 = vsyncadd [#allocation3], 0
      %s13 = sshll.u32 %s0, 4
      %s14 = int_to_ptr.hbm [resolvable:$true] %s13
      %s15 = sshll.u32 [#allocation2], 4
      %s16 = int_to_ptr.vmem [resolvable:$true] %s15
      %18 = dma.hbm_to_vmem [thread:$0]  %s14, 128, %s16, [#allocation3]
    $region5: #{tpu_custom_call.1} parent=1 // pred_fallthru
      _
    // Predicated region
    $region6: #{tpu_custom_call.1} parent=1 // pred_check
      _
    $region7: #{tpu_custom_call.1} parent=1 // pred_check_branch
      %20 = sbr.rel (0) target = $region9
    $region8: #{tpu_custom_call.1} parent=1 // pred_region
      %22 = dma.done [#allocation3], 128
    $region9: #{tpu_custom_call.1} parent=1 // pred_fallthru
      _
    %v23 = vld [vmem:[#allocation2] sm:$0xff]
    %24 = vrot.lane.b32.xlu0 %v23, 1
    %v25 = vpop.permute.xlu0 %24
    %26 = vst [vmem:[#allocation5] sm:$0xff] %v25
    // Predicated region
    $region10: #{tpu_custom_call.1} parent=1 // pred_check
      _
    $region11: #{tpu_custom_call.1} parent=1 // pred_check_branch
      %28 = sbr.rel (0) target = $region13
    $region12: #{tpu_custom_call.1} parent=1 // pred_region
      %30 = vsyncadd [#allocation4], 0
      %s32 = sshll.u32 [#allocation5], 4
      %s33 = int_to_ptr.vmem [resolvable:$true] %s32
      %s34 = sshll.u32 %s1, 4
      %s35 = int_to_ptr.hbm [resolvable:$true] %s34
      %37 = dma.vmem_to_hbm [thread:$0]  %s33, 128, %s35, [#allocation4]
    $region13: #{tpu_custom_call.1} parent=1 // pred_fallthru
      _
    // Predicated region
    $region14: #{tpu_custom_call.1} parent=1 // pred_check
      _
    $region15: #{tpu_custom_call.1} parent=1 // pred_check_branch
      %39 = sbr.rel (0) target = $region17
    $region16: #{tpu_custom_call.1} parent=1 // pred_region
      %41 = dma.done [#allocation4], 128
    $region17: #{tpu_custom_call.1} parent=1 // pred_fallthru
      _
    %42 = vsyncpa [#allocation3], 1
    %43 = vsyncpa [#allocation4], 1

</llo_original>
